<compile_context>
chip_gen: v7x
topology: tpu7x:2x2x1
jax: 0.10.0
libtpu: 0.0.40
codegen_flags: <defaults>
</compile_context>

<pallas_src>
import functools

import jax
import jax.numpy as jnp
from jax.experimental import pallas as pl
from jax.experimental.pallas import tpu as pltpu

LANE = 128     # lane width; padded action dim
Q_PAD = 8      # padded q output width (keeps the writeback DMA small)

_TB_CANDIDATES = (1024, 512, 256)
_STEP_OVERHEAD_ROWS = 128   # ~0.35us/step expressed as equivalent batch rows


def _round_up(n, m):
    return ((n + m - 1) // m) * m


def _choose_tb(B):
    """Batch tile: large (amortize per-step overhead), >=2 grid steps when
    possible (v7x megacore), modest padding waste."""
    Bp8 = _round_up(B, 8)
    if Bp8 <= 2 * _TB_CANDIDATES[0]:
        # Split roughly in half (8-row aligned): 1-2 grid steps, <=8 rows pad.
        return min(Bp8, _round_up(pl.cdiv(Bp8, 2), 8))

    # Large batch: pick the tile minimizing padded rows + per-step overhead.
    def cost(tb):
        bp = _round_up(Bp8, tb)
        return bp + (bp // tb) * _STEP_OVERHEAD_ROWS

    return min(_TB_CANDIDATES, key=lambda tb: (cost(tb), -tb))


def _actor_critic_kernel(x_ref,
                         w1f_ref, b1f_ref,   # fused [actor W1 | critic Wx] + fused bias (f32)
                         aw2_ref, ab2_ref,   # actor hidden layer 2
                         aw3_ref, ab3_ref,   # actor output (act dim padded to LANE)
                         cwa_ref,            # critic pi-weight (act_limit folded, rows padded)
                         cw2_ref, cb2_ref,   # critic hidden layer 2
                         cw3_ref, cb3_ref,   # critic output (padded to Q_PAD lanes)
                         q_ref,
                         *, h1):
    """One batch tile of the TD3 Actor_Critic forward pass."""
    wdt = w1f_ref.dtype   # bf16 (default) or f32; explicit choice made in pack_params

    def mm(a, w_ref):
        # MXU matmul: operands in the weight dtype, f32 accumulation.
        return jnp.dot(a.astype(wdt), w_ref[...],
                       preferred_element_type=jnp.float32)

    x = x_ref[...]

    # One fused matmul for both consumers of x: [actor hidden1 | critic x-part].
    t = mm(x, w1f_ref) + b1f_ref[...]
    h = jnp.maximum(t[:, :h1], 0.0)          # actor hidden 1 (ReLU), f32
    cx = t[:, h1:]                           # x @ cwx + cb1 (critic x-part, pre-ReLU)

    # Actor: -> Linear -> ReLU -> Linear -> Tanh (act_limit folded into cwa).
    h = jnp.maximum(mm(h, aw2_ref) + ab2_ref[...], 0.0)
    pi = jnp.tanh(mm(h, aw3_ref) + ab3_ref[...])

    # Critic1 on concat([x, pi]) in split-weight form (exact):
    c = jnp.maximum(cx + mm(pi, cwa_ref), 0.0)
    c = jnp.maximum(mm(c, cw2_ref) + cb2_ref[...], 0.0)
    q = mm(c, cw3_ref) + cb3_ref[...]

    q_ref[...] = q.astype(q_ref.dtype)       # (TB, Q_PAD) store


def pack_params(params, act_limit, act_dim, use_bf16=True):
    """Fuse / pad / (optionally) bf16-cast raw params into the kernel's operands.

    Call ONCE per parameter update and reuse the result across forward calls.
    Matmul weights go to bf16 (f32 accumulation in-kernel); biases stay f32.
    """
    (aw1, ab1, aw2, ab2, aw3, ab3,
     cwx, cwa, cb1, cw2, cb2, cw3, cb3) = params
    assert aw1.shape[1] == cwx.shape[1], (
        "fused first matmul requires actor/critic to share the first hidden width")
    h1 = aw1.shape[1]
    h2 = aw2.shape[1]
    wdt = jnp.bfloat16 if use_bf16 else jnp.float32

    # Fuse the two consumers of x; biases stay f32 (added post-accumulation).
    w1f = jnp.concatenate([aw1, cwx], axis=1).astype(wdt)           # (in, 2*h1)
    b1f = jnp.concatenate([ab1, cb1], axis=1).astype(jnp.float32)   # (1, 2*h1)

    # Pad the action dim to 128 lanes (zeros keep the math exact).
    aw3p = jnp.zeros((h2, LANE), jnp.float32).at[:, :act_dim].set(aw3).astype(wdt)
    ab3p = jnp.zeros((1, LANE), jnp.float32).at[:, :act_dim].set(ab3)
    # Fold act_limit into the critic's pi-weight; pad rows to 128.
    cwa_p = jnp.zeros((LANE, h1), jnp.float32).at[:act_dim, :].set(
        jnp.float32(act_limit) * cwa).astype(wdt)

    # q output padded to only Q_PAD lanes (small HBM writeback); the wrapper
    # slices q[:, :1] back out.
    cw3p = jnp.zeros((h2, Q_PAD), jnp.float32).at[:, :1].set(cw3).astype(wdt)
    cb3p = jnp.zeros((1, Q_PAD), jnp.float32).at[:, :1].set(cb3)

    return (w1f, b1f,
            aw2.astype(wdt), ab2.astype(jnp.float32),
            aw3p, ab3p, cwa_p,
            cw2.astype(wdt), cb2.astype(jnp.float32),
            cw3p, cb3p)


def actor_critic_forward(x, packed):
    """x: (B, in_dim) float32.  packed: output of pack_params (reused across calls).
    Returns q1_pi: (B, 1) float32."""
    x = x.astype(jnp.float32)
    B, in_dim = x.shape
    h1 = packed[2].shape[0]          # aw2 is (h1, h2); static split point

    TB = _choose_tb(B)
    Bp = _round_up(B, TB)
    if Bp != B:
        x = jnp.pad(x, ((0, Bp - B), (0, 0)))
    grid = (Bp // TB,)

    # Weights/biases: full-block, constant index_map -> VMEM-resident across
    # the pipelined / megacore-sharded batch grid.
    # TODO(synk): for much larger hidden sizes, add pipeline_mode=pl.Buffered(1)
    # on these specs and set vmem_limit_bytes (v7x has only 64 MiB VMEM).
    weight_specs = [pl.BlockSpec(w.shape, lambda i: (0, 0)) for w in packed]

    kernel = functools.partial(_actor_critic_kernel, h1=h1)
    q_pad = pl.pallas_call(
        kernel,
        out_shape=jax.ShapeDtypeStruct((Bp, Q_PAD), jnp.float32),
        grid=grid,
        in_specs=[pl.BlockSpec((TB, in_dim), lambda i: (i, 0))] + weight_specs,
        out_specs=pl.BlockSpec((TB, Q_PAD), lambda i: (i, 0)),
        compiler_params=pltpu.CompilerParams(
            dimension_semantics=("parallel",)),
    )(x, *packed)

    return q_pad[:B, :1]


def init_params(key, in_dim, act_dim, hidden_sizes):
    """Xavier-normal weights, zero biases (matches the PyTorch init)."""
    h1, h2 = hidden_sizes

    def xavier(k, fan_in, fan_out):
        std = (2.0 / (fan_in + fan_out)) ** 0.5
        return std * jax.random.normal(k, (fan_in, fan_out), dtype=jnp.float32)

    keys = jax.random.split(key, 6)
    # actor
    aw1 = xavier(keys[0], in_dim, h1)
    aw2 = xavier(keys[1], h1, h2)
    aw3 = xavier(keys[2], h2, act_dim)
    ab1 = jnp.zeros((1, h1), jnp.float32)
    ab2 = jnp.zeros((1, h2), jnp.float32)
    ab3 = jnp.zeros((1, act_dim), jnp.float32)
    # critic1: first-layer weight over concat([x, pi]), split into x / pi parts
    cw1 = xavier(keys[3], in_dim + act_dim, h1)
    cwx = cw1[:in_dim, :]
    cwa = cw1[in_dim:, :]
    cw2 = xavier(keys[4], h1, h2)
    cw3 = xavier(keys[5], h2, 1)
    cb1 = jnp.zeros((1, h1), jnp.float32)
    cb2 = jnp.zeros((1, h2), jnp.float32)
    cb3 = jnp.zeros((1, 1), jnp.float32)
    return (aw1, ab1, aw2, ab2, aw3, ab3,
            cwx, cwa, cb1, cw2, cb2, cw3, cb3)


def reference_forward(x, params, act_limit):
    """f32 HIGHEST-precision reference of Actor_Critic.forward."""
    (aw1, ab1, aw2, ab2, aw3, ab3,
     cwx, cwa, cb1, cw2, cb2, cw3, cb3) = params
    hi = jax.lax.Precision.HIGHEST

    def mm(a, b):
        return jnp.dot(a, b, precision=hi)

    h = jax.nn.relu(mm(x, aw1) + ab1)
    h = jax.nn.relu(mm(h, aw2) + ab2)
    pi = act_limit * jnp.tanh(mm(h, aw3) + ab3)
    xa = jnp.concatenate([x, pi], axis=1)
    c = jax.nn.relu(mm(xa, jnp.concatenate([cwx, cwa], axis=0)) + cb1)
    c = jax.nn.relu(mm(c, cw2) + cb2)
    return mm(c, cw3) + cb3


if __name__ == "__main__":
    key = jax.random.PRNGKey(0)
    k_x, k_p, k_x2 = jax.random.split(key, 3)

    # Small shapes consistent with the module: obs dim 16, action dim 4,
    # hidden_sizes=(128, 128), act_limit 2.0.
    in_dim, act_dim = 16, 4
    hidden_sizes = (128, 128)
    act_limit = 2.0
    params = init_params(k_p, in_dim, act_dim, hidden_sizes)

    # Pack ONCE (per parameter update), reuse across forward calls.
    packed_bf16 = pack_params(params, act_limit, act_dim, use_bf16=True)
    packed_f32 = pack_params(params, act_limit, act_dim, use_bf16=False)

    # Test 1: small batch (grid=(1,)), bf16-weight fast path.
    # Documented tolerance: bf16 matmul operands with f32 accumulation -> ~1e-2.
    B = 8
    x = jax.random.normal(k_x, (B, in_dim), dtype=jnp.float32)
    q = jax.block_until_ready(actor_critic_forward(x, packed_bf16))
    q_ref = reference_forward(x, params, act_limit)
    assert q.shape == (B, 1), q.shape
    assert jnp.allclose(q, q_ref, atol=2e-2, rtol=2e-2), (q, q_ref)

    # f32-weight path on the same input (structure check, MXU default precision).
    q32 = jax.block_until_ready(actor_critic_forward(x, packed_f32))
    assert jnp.allclose(q32, q_ref, atol=1e-2, rtol=1e-2), (q32, q_ref)

    # Test 2: batch exercising row padding + a 2-step "parallel" grid.
    B2 = 300
    x2 = jax.random.normal(k_x2, (B2, in_dim), dtype=jnp.float32)
    q2 = jax.block_until_ready(actor_critic_forward(x2, packed_bf16))
    q2_ref = reference_forward(x2, params, act_limit)
    assert q2.shape == (B2, 1), q2.shape
    assert jnp.allclose(q2, q2_ref, atol=2e-2, rtol=2e-2), (q2, q2_ref)

    print("KERNEL_OK")
</pallas_src>

<mosaic_0001>
module attributes {stable_mosaic.version = 11 : i64} {
  func.func @_actor_critic_kernel(%arg0: i32, %arg1: memref<8x16xf32, #tpu.memory_space<vmem>>, %arg2: memref<16x256xbf16, #tpu.memory_space<vmem>>, %arg3: memref<1x256xf32, #tpu.memory_space<vmem>>, %arg4: memref<128x128xbf16, #tpu.memory_space<vmem>>, %arg5: memref<1x128xf32, #tpu.memory_space<vmem>>, %arg6: memref<128x128xbf16, #tpu.memory_space<vmem>>, %arg7: memref<1x128xf32, #tpu.memory_space<vmem>>, %arg8: memref<128x128xbf16, #tpu.memory_space<vmem>>, %arg9: memref<128x128xbf16, #tpu.memory_space<vmem>>, %arg10: memref<1x128xf32, #tpu.memory_space<vmem>>, %arg11: memref<128x8xbf16, #tpu.memory_space<vmem>>, %arg12: memref<1x8xf32, #tpu.memory_space<vmem>>, %arg13: memref<8x8xf32, #tpu.memory_space<vmem>>) attributes {dimension_semantics = [#tpu.dimension_semantics<parallel>], iteration_bounds = array<i64: 1>, scalar_prefetch = 0 : i64, scratch_operands = 0 : i64, tpu.core_type = #tpu.core_type<tc>, window_params = [{transform_indices = @transform_0, window_bounds = array<i64: 8, 16>}, {pipeline_mode = #tpu.pipeline_mode<synchronous>, transform_indices = @transform_1, window_bounds = array<i64: 16, 256>}, {pipeline_mode = #tpu.pipeline_mode<synchronous>, transform_indices = @transform_2, window_bounds = array<i64: 1, 256>}, {pipeline_mode = #tpu.pipeline_mode<synchronous>, transform_indices = @transform_3, window_bounds = array<i64: 128, 128>}, {pipeline_mode = #tpu.pipeline_mode<synchronous>, transform_indices = @transform_4, window_bounds = array<i64: 1, 128>}, {pipeline_mode = #tpu.pipeline_mode<synchronous>, transform_indices = @transform_5, window_bounds = array<i64: 128, 128>}, {pipeline_mode = #tpu.pipeline_mode<synchronous>, transform_indices = @transform_6, window_bounds = array<i64: 1, 128>}, {pipeline_mode = #tpu.pipeline_mode<synchronous>, transform_indices = @transform_7, window_bounds = array<i64: 128, 128>}, {pipeline_mode = #tpu.pipeline_mode<synchronous>, transform_indices = @transform_8, window_bounds = array<i64: 128, 128>}, {pipeline_mode = #tpu.pipeline_mode<synchronous>, transform_indices = @transform_9, window_bounds = array<i64: 1, 128>}, {pipeline_mode = #tpu.pipeline_mode<synchronous>, transform_indices = @transform_10, window_bounds = array<i64: 128, 8>}, {pipeline_mode = #tpu.pipeline_mode<synchronous>, transform_indices = @transform_11, window_bounds = array<i64: 1, 8>}, {transform_indices = @transform_12, window_bounds = array<i64: 8, 8>}]} {
    %c0 = arith.constant 0 : index
    %c0_0 = arith.constant 0 : index
    %0 = vector.load %arg1[%c0, %c0_0] : memref<8x16xf32, #tpu.memory_space<vmem>>, vector<8x16xf32>
    %1 = arith.truncf %0 : vector<8x16xf32> to vector<8x16xbf16>
    %c0_1 = arith.constant 0 : index
    %c0_2 = arith.constant 0 : index
    %2 = vector.load %arg2[%c0_1, %c0_2] : memref<16x256xbf16, #tpu.memory_space<vmem>>, vector<16x256xbf16>
    %cst = arith.constant dense<0.000000e+00> : vector<8x256xf32>
    %3 = tpu.matmul %1, %2, %cst {dimension_numbers = #tpu.dot_dimension_numbers<[1], [0], [0], [1], [0, 0, 1, 1], [], []>} : vector<8x16xbf16>, vector<16x256xbf16>, vector<8x256xf32> -> vector<8x256xf32>
    %c0_3 = arith.constant 0 : index
    %c0_4 = arith.constant 0 : index
    %4 = vector.load %arg3[%c0_3, %c0_4] : memref<1x256xf32, #tpu.memory_space<vmem>>, vector<1x256xf32>
    %5 = vector.broadcast %4 : vector<1x256xf32> to vector<8x256xf32>
    %6 = arith.addf %3, %5 : vector<8x256xf32>
    %7 = vector.extract_strided_slice %6 {offsets = [0, 0], sizes = [8, 128], strides = [1, 1]} : vector<8x256xf32> to vector<8x128xf32>
    %cst_5 = arith.constant 0.000000e+00 : f32
    %8 = vector.broadcast %cst_5 : f32 to vector<8x128xf32>
    %9 = arith.maximumf %7, %8 : vector<8x128xf32>
    %10 = vector.extract_strided_slice %6 {offsets = [0, 128], sizes = [8, 128], strides = [1, 1]} : vector<8x256xf32> to vector<8x128xf32>
    %11 = arith.truncf %9 : vector<8x128xf32> to vector<8x128xbf16>
    %c0_6 = arith.constant 0 : index
    %c0_7 = arith.constant 0 : index
    %12 = vector.load %arg4[%c0_6, %c0_7] : memref<128x128xbf16, #tpu.memory_space<vmem>>, vector<128x128xbf16>
    %cst_8 = arith.constant dense<0.000000e+00> : vector<8x128xf32>
    %13 = tpu.matmul %11, %12, %cst_8 {dimension_numbers = #tpu.dot_dimension_numbers<[1], [0], [0], [1], [0, 0, 1, 1], [], []>} : vector<8x128xbf16>, vector<128x128xbf16>, vector<8x128xf32> -> vector<8x128xf32>
    %c0_9 = arith.constant 0 : index
    %c0_10 = arith.constant 0 : index
    %14 = vector.load %arg5[%c0_9, %c0_10] : memref<1x128xf32, #tpu.memory_space<vmem>>, vector<1x128xf32>
    %15 = vector.broadcast %14 : vector<1x128xf32> to vector<8x128xf32>
    %16 = arith.addf %13, %15 : vector<8x128xf32>
    %cst_11 = arith.constant 0.000000e+00 : f32
    %17 = vector.broadcast %cst_11 : f32 to vector<8x128xf32>
    %18 = arith.maximumf %16, %17 : vector<8x128xf32>
    %19 = arith.truncf %18 : vector<8x128xf32> to vector<8x128xbf16>
    %c0_12 = arith.constant 0 : index
    %c0_13 = arith.constant 0 : index
    %20 = vector.load %arg6[%c0_12, %c0_13] : memref<128x128xbf16, #tpu.memory_space<vmem>>, vector<128x128xbf16>
    %cst_14 = arith.constant dense<0.000000e+00> : vector<8x128xf32>
    %21 = tpu.matmul %19, %20, %cst_14 {dimension_numbers = #tpu.dot_dimension_numbers<[1], [0], [0], [1], [0, 0, 1, 1], [], []>} : vector<8x128xbf16>, vector<128x128xbf16>, vector<8x128xf32> -> vector<8x128xf32>
    %c0_15 = arith.constant 0 : index
    %c0_16 = arith.constant 0 : index
    %22 = vector.load %arg7[%c0_15, %c0_16] : memref<1x128xf32, #tpu.memory_space<vmem>>, vector<1x128xf32>
    %23 = vector.broadcast %22 : vector<1x128xf32> to vector<8x128xf32>
    %24 = arith.addf %21, %23 : vector<8x128xf32>
    %25 = math.tanh %24 : vector<8x128xf32>
    %26 = arith.truncf %25 : vector<8x128xf32> to vector<8x128xbf16>
    %c0_17 = arith.constant 0 : index
    %c0_18 = arith.constant 0 : index
    %27 = vector.load %arg8[%c0_17, %c0_18] : memref<128x128xbf16, #tpu.memory_space<vmem>>, vector<128x128xbf16>
    %cst_19 = arith.constant dense<0.000000e+00> : vector<8x128xf32>
    %28 = tpu.matmul %26, %27, %cst_19 {dimension_numbers = #tpu.dot_dimension_numbers<[1], [0], [0], [1], [0, 0, 1, 1], [], []>} : vector<8x128xbf16>, vector<128x128xbf16>, vector<8x128xf32> -> vector<8x128xf32>
    %29 = arith.addf %10, %28 : vector<8x128xf32>
    %cst_20 = arith.constant 0.000000e+00 : f32
    %30 = vector.broadcast %cst_20 : f32 to vector<8x128xf32>
    %31 = arith.maximumf %29, %30 : vector<8x128xf32>
    %32 = arith.truncf %31 : vector<8x128xf32> to vector<8x128xbf16>
    %c0_21 = arith.constant 0 : index
    %c0_22 = arith.constant 0 : index
    %33 = vector.load %arg9[%c0_21, %c0_22] : memref<128x128xbf16, #tpu.memory_space<vmem>>, vector<128x128xbf16>
    %cst_23 = arith.constant dense<0.000000e+00> : vector<8x128xf32>
    %34 = tpu.matmul %32, %33, %cst_23 {dimension_numbers = #tpu.dot_dimension_numbers<[1], [0], [0], [1], [0, 0, 1, 1], [], []>} : vector<8x128xbf16>, vector<128x128xbf16>, vector<8x128xf32> -> vector<8x128xf32>
    %c0_24 = arith.constant 0 : index
    %c0_25 = arith.constant 0 : index
    %35 = vector.load %arg10[%c0_24, %c0_25] : memref<1x128xf32, #tpu.memory_space<vmem>>, vector<1x128xf32>
    %36 = vector.broadcast %35 : vector<1x128xf32> to vector<8x128xf32>
    %37 = arith.addf %34, %36 : vector<8x128xf32>
    %cst_26 = arith.constant 0.000000e+00 : f32
    %38 = vector.broadcast %cst_26 : f32 to vector<8x128xf32>
    %39 = arith.maximumf %37, %38 : vector<8x128xf32>
    %40 = arith.truncf %39 : vector<8x128xf32> to vector<8x128xbf16>
    %c0_27 = arith.constant 0 : index
    %c0_28 = arith.constant 0 : index
    %41 = vector.load %arg11[%c0_27, %c0_28] : memref<128x8xbf16, #tpu.memory_space<vmem>>, vector<128x8xbf16>
    %cst_29 = arith.constant dense<0.000000e+00> : vector<8x8xf32>
    %42 = tpu.matmul %40, %41, %cst_29 {dimension_numbers = #tpu.dot_dimension_numbers<[1], [0], [0], [1], [0, 0, 1, 1], [], []>} : vector<8x128xbf16>, vector<128x8xbf16>, vector<8x8xf32> -> vector<8x8xf32>
    %c0_30 = arith.constant 0 : index
    %c0_31 = arith.constant 0 : index
    %43 = vector.load %arg12[%c0_30, %c0_31] : memref<1x8xf32, #tpu.memory_space<vmem>>, vector<1x8xf32>
    %44 = vector.broadcast %43 : vector<1x8xf32> to vector<8x8xf32>
    %45 = arith.addf %42, %44 : vector<8x8xf32>
    %c0_32 = arith.constant 0 : index
    %c0_33 = arith.constant 0 : index
    %46 = vector.load %arg13[%c0_32, %c0_33] : memref<8x8xf32, #tpu.memory_space<vmem>>, vector<8x8xf32>
    tpu.vector_store %arg13[%c0_32, %c0_33], %45 {strides = array<i32>} : memref<8x8xf32, #tpu.memory_space<vmem>>, vector<8x8xf32>,
    return
  }
  func.func @transform_0(%arg0: i32) -> (i32, i32) {
    %c0_i32 = arith.constant 0 : i32
    %c0_i32_0 = arith.constant 0 : i32
    return %arg0, %c0_i32 : i32, i32
  }
  func.func @transform_1(%arg0: i32) -> (i32, i32) {
    %c0_i32 = arith.constant 0 : i32
    %c0_i32_0 = arith.constant 0 : i32
    %c0_i32_1 = arith.constant 0 : i32
    return %c0_i32, %c0_i32_0 : i32, i32
  }
  func.func @transform_2(%arg0: i32) -> (i32, i32) {
    %c0_i32 = arith.constant 0 : i32
    %c0_i32_0 = arith.constant 0 : i32
    %c0_i32_1 = arith.constant 0 : i32
    return %c0_i32, %c0_i32_0 : i32, i32
  }
  func.func @transform_3(%arg0: i32) -> (i32, i32) {
    %c0_i32 = arith.constant 0 : i32
    %c0_i32_0 = arith.constant 0 : i32
    %c0_i32_1 = arith.constant 0 : i32
    return %c0_i32, %c0_i32_0 : i32, i32
  }
  func.func @transform_4(%arg0: i32) -> (i32, i32) {
    %c0_i32 = arith.constant 0 : i32
    %c0_i32_0 = arith.constant 0 : i32
    %c0_i32_1 = arith.constant 0 : i32
    return %c0_i32, %c0_i32_0 : i32, i32
  }
  func.func @transform_5(%arg0: i32) -> (i32, i32) {
    %c0_i32 = arith.constant 0 : i32
    %c0_i32_0 = arith.constant 0 : i32
    %c0_i32_1 = arith.constant 0 : i32
    return %c0_i32, %c0_i32_0 : i32, i32
  }
  func.func @transform_6(%arg0: i32) -> (i32, i32) {
    %c0_i32 = arith.constant 0 : i32
    %c0_i32_0 = arith.constant 0 : i32
    %c0_i32_1 = arith.constant 0 : i32
    return %c0_i32, %c0_i32_0 : i32, i32
  }
  func.func @transform_7(%arg0: i32) -> (i32, i32) {
    %c0_i32 = arith.constant 0 : i32
    %c0_i32_0 = arith.constant 0 : i32
    %c0_i32_1 = arith.constant 0 : i32
    return %c0_i32, %c0_i32_0 : i32, i32
  }
  func.func @transform_8(%arg0: i32) -> (i32, i32) {
    %c0_i32 = arith.constant 0 : i32
    %c0_i32_0 = arith.constant 0 : i32
    %c0_i32_1 = arith.constant 0 : i32
    return %c0_i32, %c0_i32_0 : i32, i32
  }
  func.func @transform_9(%arg0: i32) -> (i32, i32) {
    %c0_i32 = arith.constant 0 : i32
    %c0_i32_0 = arith.constant 0 : i32
    %c0_i32_1 = arith.constant 0 : i32
    return %c0_i32, %c0_i32_0 : i32, i32
  }
  func.func @transform_10(%arg0: i32) -> (i32, i32) {
    %c0_i32 = arith.constant 0 : i32
    %c0_i32_0 = arith.constant 0 : i32
    %c0_i32_1 = arith.constant 0 : i32
    return %c0_i32, %c0_i32_0 : i32, i32
  }
  func.func @transform_11(%arg0: i32) -> (i32, i32) {
    %c0_i32 = arith.constant 0 : i32
    %c0_i32_0 = arith.constant 0 : i32
    %c0_i32_1 = arith.constant 0 : i32
    return %c0_i32, %c0_i32_0 : i32, i32
  }
  func.func @transform_12(%arg0: i32) -> (i32, i32) {
    %c0_i32 = arith.constant 0 : i32
    %c0_i32_0 = arith.constant 0 : i32
    return %arg0, %c0_i32 : i32, i32
  }
}

</mosaic_0001>

<llo_original>
// kernel: tpu_custom_call.1
$region0: #{tpu_custom_call.1}
  #allocation0 [shape = 'u32[]', space=smem, size = 0x4, offset = 0x4, fixed_abs, tag = 'smem constant byte address 0x4 - core index']
  #allocation1 [shape = 'u32[144,128]{1,0:T(1,128)}', space=vmem, size = 0x12000, scoped, tag = 'internal scratch']
  %s0 = inlined_call_operand.vmem [shape: f32[8,16], index: 0, kind: input, shape index: {}]
  %s1 = inlined_call_operand.hbm [shape: bf16[16,256], index: 1, kind: input, shape index: {}]
  %s2 = inlined_call_operand.vmem [shape: f32[1,256], index: 2, kind: input, shape index: {}]
  %s3 = inlined_call_operand.vmem [shape: bf16[128,128], index: 3, kind: input, shape index: {}]
  %s4 = inlined_call_operand.vmem [shape: f32[1,128], index: 4, kind: input, shape index: {}]
  %s5 = inlined_call_operand.hbm [shape: bf16[128,128], index: 5, kind: input, shape index: {}]
  %s6 = inlined_call_operand.vmem [shape: f32[1,128], index: 6, kind: input, shape index: {}]
  %s7 = inlined_call_operand.hbm [shape: bf16[128,128], index: 7, kind: input, shape index: {}]
  %s8 = inlined_call_operand.hbm [shape: bf16[128,128], index: 8, kind: input, shape index: {}]
  %s9 = inlined_call_operand.vmem [shape: f32[1,128], index: 9, kind: input, shape index: {}]
  %s10 = inlined_call_operand.vmem [shape: bf16[128,8], index: 10, kind: input, shape index: {}]
  %s11 = inlined_call_operand.vmem [shape: f32[1,8], index: 11, kind: input, shape index: {}]
  %s12 = inlined_call_operand.hbm [shape: f32[8,8], index: 12, kind: output, shape index: {}]
  %s13 = sld [smem:[#allocation0]]
  $region74: #{tpu_custom_call.1} parent=0
    _
  %s15 = ssub.s32 1, %s13
  %s16 = scalar_select 0, %s15, %s13
  $region1: #{tpu_custom_call.1} parent=0
    #allocation2 [shape = 'u8[8192]{0}', space=vmem, size = 0x2000, scoped, tag = 'input window, operand 1, single buffered']
    #allocation3 [shape = 's32[1]{0}', space=sflag, size = 0x4, scoped, tag = 'scoped memory for tpu_custom_call.1']
    #allocation4 [shape = 's32[1]{0}', space=sflag, size = 0x4, scoped, tag = 'scoped memory for tpu_custom_call.1']
    #allocation5 [shape = 'u8[32768]{0}', space=vmem, size = 0x8000, scoped, tag = 'input window, operand 5, single buffered']
    #allocation6 [shape = 's32[1]{0}', space=sflag, size = 0x4, scoped, tag = 'scoped memory for tpu_custom_call.1']
    #allocation7 [shape = 'u8[32768]{0}', space=vmem, size = 0x8000, scoped, tag = 'input window, operand 7, single buffered']
    #allocation8 [shape = 'u8[32768]{0}', space=vmem, size = 0x8000, scoped, tag = 'input window, operand 8, single buffered']
    #allocation9 [shape = 's32[1]{0}', space=sflag, size = 0x4, scoped, tag = 'scoped memory for tpu_custom_call.1']
    #allocation10 [shape = 'u8[4096]{0}', space=vmem, size = 0x1000, scoped, tag = 'output window, operand 0, single buffered']
    %17 = vsyncpa [#allocation3], 0
    %18 = vsyncpa [#allocation6], 0
    %19 = vsyncpa [#allocation9], 0
    %20 = vsyncpa [#allocation4], 0
    // Predicated region
    $region2: #{tpu_custom_call.1} parent=1 // pred_check
      _
    $region3: #{tpu_custom_call.1} parent=1 // pred_check_branch
      %22 = sbr.rel (0) target = $region5
    $region4: #{tpu_custom_call.1} parent=1 // pred_region
      _
    $region5: #{tpu_custom_call.1} parent=1 // pred_fallthru
      _
    // Predicated region
    $region6: #{tpu_custom_call.1} parent=1 // pred_check
      _
    $region7: #{tpu_custom_call.1} parent=1 // pred_check_branch
      %24 = sbr.rel (0) target = $region9
    $region8: #{tpu_custom_call.1} parent=1 // pred_region
      %s26 = ssub.s32 256, 256
      %27 = vsyncadd [#allocation3], %s26
      %s28 = sshll.u32 [#allocation2], 4
      %s29 = int_to_ptr.vmem [resolvable:$true] %s28
      %34 = dma.hbm_to_vmem [thread:$0]  %s1, 256, %s29, [#allocation3], 128, 128, 8
    $region9: #{tpu_custom_call.1} parent=1 // pred_fallthru
      _
    // Predicated region
    $region10: #{tpu_custom_call.1} parent=1 // pred_check
      _
    $region11: #{tpu_custom_call.1} parent=1 // pred_check_branch
      %36 = sbr.rel (0) target = $region13
    $region12: #{tpu_custom_call.1} parent=1 // pred_region
      _
    $region13: #{tpu_custom_call.1} parent=1 // pred_fallthru
      _
    // Predicated region
    $region14: #{tpu_custom_call.1} parent=1 // pred_check
      _
    $region15: #{tpu_custom_call.1} parent=1 // pred_check_branch
      %38 = sbr.rel (0) target = $region17
    $region16: #{tpu_custom_call.1} parent=1 // pred_region
      _
    $region17: #{tpu_custom_call.1} parent=1 // pred_fallthru
      _
    // Predicated region
    $region18: #{tpu_custom_call.1} parent=1 // pred_check
      _
    $region19: #{tpu_custom_call.1} parent=1 // pred_check_branch
      %40 = sbr.rel (0) target = $region21
    $region20: #{tpu_custom_call.1} parent=1 // pred_region
      _
    $region21: #{tpu_custom_call.1} parent=1 // pred_fallthru
      _
    // Predicated region
    $region22: #{tpu_custom_call.1} parent=1 // pred_check
      _
    $region23: #{tpu_custom_call.1} parent=1 // pred_check_branch
      %42 = sbr.rel (0) target = $region25
    $region24: #{tpu_custom_call.1} parent=1 // pred_region
      %s44 = ssub.s32 1024, 1024
      %45 = vsyncadd [#allocation6], %s44
      %s46 = sshll.u32 [#allocation5], 4
      %s47 = int_to_ptr.vmem [resolvable:$true] %s46
      %52 = dma.hbm_to_vmem [thread:$0]  %s5, 1024, %s47, [#allocation6], 64, 64, 4
    $region25: #{tpu_custom_call.1} parent=1 // pred_fallthru
      _
    // Predicated region
    $region26: #{tpu_custom_call.1} parent=1 // pred_check
      _
    $region27: #{tpu_custom_call.1} parent=1 // pred_check_branch
      %54 = sbr.rel (0) target = $region29
    $region28: #{tpu_custom_call.1} parent=1 // pred_region
      _
    $region29: #{tpu_custom_call.1} parent=1 // pred_fallthru
      _
    // Predicated region
    $region30: #{tpu_custom_call.1} parent=1 // pred_check
      _
    $region31: #{tpu_custom_call.1} parent=1 // pred_check_branch
      %56 = sbr.rel (0) target = $region33
    $region32: #{tpu_custom_call.1} parent=1 // pred_region
      %s58 = ssub.s32 1024, 1024
      %59 = vsyncadd [#allocation6], %s58
      %s60 = sshll.u32 [#allocation7], 4
      %s61 = int_to_ptr.vmem [resolvable:$true] %s60
      %66 = dma.hbm_to_vmem [thread:$0]  %s7, 1024, %s61, [#allocation6], 64, 64, 4
    $region33: #{tpu_custom_call.1} parent=1 // pred_fallthru
      _
    // Predicated region
    $region34: #{tpu_custom_call.1} parent=1 // pred_check
      _
    $region35: #{tpu_custom_call.1} parent=1 // pred_check_branch
      %68 = sbr.rel (0) target = $region37
    $region36: #{tpu_custom_call.1} parent=1 // pred_region
      %s70 = ssub.s32 1024, 1024
      %71 = vsyncadd [#allocation9], %s70
      %s72 = sshll.u32 [#allocation8], 4
      %s73 = int_to_ptr.vmem [resolvable:$true] %s72
      %78 = dma.hbm_to_vmem [thread:$0]  %s8, 1024, %s73, [#allocation9], 64, 64, 4
    $region37: #{tpu_custom_call.1} parent=1 // pred_fallthru
      _
    // Predicated region
    $region38: #{tpu_custom_call.1} parent=1 // pred_check
      _
    $region39: #{tpu_custom_call.1} parent=1 // pred_check_branch
      %80 = sbr.rel (0) target = $region41
    $region40: #{tpu_custom_call.1} parent=1 // pred_region
      _
    $region41: #{tpu_custom_call.1} parent=1 // pred_fallthru
      _
    // Predicated region
    $region42: #{tpu_custom_call.1} parent=1 // pred_check
      _
    $region43: #{tpu_custom_call.1} parent=1 // pred_check_branch
      %82 = sbr.rel (0) target = $region45
    $region44: #{tpu_custom_call.1} parent=1 // pred_region
      _
    $region45: #{tpu_custom_call.1} parent=1 // pred_fallthru
      _
    // Predicated region
    $region46: #{tpu_custom_call.1} parent=1 // pred_check
      _
    $region47: #{tpu_custom_call.1} parent=1 // pred_check_branch
      %84 = sbr.rel (0) target = $region49
    $region48: #{tpu_custom_call.1} parent=1 // pred_region
      _
    $region49: #{tpu_custom_call.1} parent=1 // pred_fallthru
      _
    // Predicated region
    $region50: #{tpu_custom_call.1} parent=1 // pred_check
      _
    $region51: #{tpu_custom_call.1} parent=1 // pred_check_branch
      %86 = sbr.rel (0) target = $region53
    $region52: #{tpu_custom_call.1} parent=1 // pred_region
      %87 = dma.done [#allocation3], 256
    $region53: #{tpu_custom_call.1} parent=1 // pred_fallthru
      _
    // Predicated region
    $region54: #{tpu_custom_call.1} parent=1 // pred_check
      _
    $region55: #{tpu_custom_call.1} parent=1 // pred_check_branch
      %89 = sbr.rel (0) target = $region57
    $region56: #{tpu_custom_call.1} parent=1 // pred_region
      %90 = dma.done [#allocation6], 1024
    $region57: #{tpu_custom_call.1} parent=1 // pred_fallthru
      _
    // Predicated region
    $region58: #{tpu_custom_call.1} parent=1 // pred_check
      _
    $region59: #{tpu_custom_call.1} parent=1 // pred_check_branch
      %92 = sbr.rel (0) target = $region61
    $region60: #{tpu_custom_call.1} parent=1 // pred_region
      %93 = dma.done [#allocation6], 1024
    $region61: #{tpu_custom_call.1} parent=1 // pred_fallthru
      _
    // Predicated region
    $region62: #{tpu_custom_call.1} parent=1 // pred_check
      _
    $region63: #{tpu_custom_call.1} parent=1 // pred_check_branch
      %95 = sbr.rel (0) target = $region65
    $region64: #{tpu_custom_call.1} parent=1 // pred_region
      %96 = dma.done [#allocation9], 1024
    $region65: #{tpu_custom_call.1} parent=1 // pred_fallthru
      _
    %v98 = vld [vmem:[%s0] sm:$0xff]
    %v99 = vpack.c.bf16 %v98, %v98
    %v100 = vld [vmem:[#allocation2] sm:$0xff]
    %v101 = vld [vmem:[#allocation2 + $0x8] sm:$0xff]
    %v102 = vld [vmem:[%s2] sm:$0x3]
    %v104 = vlaneseq
    %v105 = vshrl.u32 %v104, 7
    %v106 = vsub.s32 0, %v105
    %v107 = vrot.slane %v102, %v106
    %v108 = vlaneseq
    %v109 = vshrl.u32 %v108, 7
    %v110 = vsub.s32 1, %v109
    %v111 = vrot.slane %v102, %v110
    %v116 = vunpack.c.l.b16 %v100
    %v117 = vunpack.c.h.b16 %v100
    %v118 = vunpack.c.l.b16 %v101
    %v119 = vunpack.c.h.b16 %v101
    %v120 = vpack.c.b16 %v118, %v116
    %v121 = vpack.c.b16 %v119, %v117
    %vm124 = vcmask 130048
    %v126 = vsel %vm124, %v99, 0
    %128 = vmatprep.subr.bf16.mxu0 %v121
    %129 = vmatpush1.bf16.msra.mxu0 %v120
    %130 = vmatprep.subr.bf16.mxu0 0
    %131 = vmatpush1.bf16.msra.mxu0 0
    %132 = vmatprep.subr.bf16.mxu0 0
    %133 = vmatpush1.bf16.msra.mxu0 0
    %134 = vmatprep.subr.bf16.mxu0 0
    %135 = vmatpush1.bf16.msra.mxu0 0
    %136 = vmatprep.subr.bf16.mxu0 0
    %137 = vmatpush1.bf16.msra.mxu0 0
    %138 = vmatprep.subr.bf16.mxu0 0
    %139 = vmatpush1.bf16.msra.mxu0 0
    %140 = vmatprep.subr.bf16.mxu0 0
    %141 = vmatpush1.bf16.msra.mxu0 0
    %142 = vmatprep.subr.bf16.mxu0 0
    %143 = vmatpush1.bf16.msra.mxu0 0
    %144 = vmatprep.subr.bf16.mxu0 0
    %145 = vmatpush1.bf16.msra.mxu0 0
    %146 = vmatprep.subr.bf16.mxu0 0
    %147 = vmatpush1.bf16.msra.mxu0 0
    %148 = vmatprep.subr.bf16.mxu0 0
    %149 = vmatpush1.bf16.msra.mxu0 0
    %150 = vmatprep.subr.bf16.mxu0 0
    %151 = vmatpush1.bf16.msra.mxu0 0
    %152 = vmatprep.subr.bf16.mxu0 0
    %153 = vmatpush1.bf16.msra.mxu0 0
    %154 = vmatprep.subr.bf16.mxu0 0
    %155 = vmatpush1.bf16.msra.mxu0 0
    %156 = vmatprep.subr.bf16.mxu0 0
    %157 = vmatpush1.bf16.msra.mxu0 0
    %158 = vmatprep.subr.bf16.mxu0 0
    %159 = vmatpush1.bf16.msra.mxu0 0
    %160 = vmatprep.mubr.bf16.mxu0 0
    %161 = vmatmul.mubr.bf16.gmra.mrb[0].mxu0 %v126
    %v162 = vpop.f32.mrb[0].mxu0
    %v163 = vadd.f32 %v107, %v162
    %v164 = vpop.f32.mrb[0].mxu0
    %v165 = vadd.f32 %v111, %v164
    %v166 = vpop.f32.mrb[0].mxu0
    %v167 = vpop.f32.mrb[0].mxu0
    %168 = vdwg.mxu0
    %v169 = vmax.f32 %v163, 0.0
    %v170 = vpack.c.bf16 %v169, %v169
    %v171 = vld [vmem:[%s3] sm:$0xf]
    %v172 = vld [vmem:[%s3 + $0x4] sm:$0xf]
    %v173 = vld [vmem:[%s3 + $0x8] sm:$0xf]
    %v174 = vld [vmem:[%s3 + $0xc] sm:$0xf]
    %v175 = vld [vmem:[%s3 + $0x10] sm:$0xf]
    %v176 = vld [vmem:[%s3 + $0x14] sm:$0xf]
    %v177 = vld [vmem:[%s3 + $0x18] sm:$0xf]
    %v178 = vld [vmem:[%s3 + $0x1c] sm:$0xf]
    %v179 = vld [vmem:[%s3 + $0x20] sm:$0xf]
    %v180 = vld [vmem:[%s3 + $0x24] sm:$0xf]
    %v181 = vld [vmem:[%s3 + $0x28] sm:$0xf]
    %v182 = vld [vmem:[%s3 + $0x2c] sm:$0xf]
    %v183 = vld [vmem:[%s3 + $0x30] sm:$0xf]
    %v184 = vld [vmem:[%s3 + $0x34] sm:$0xf]
    %v185 = vld [vmem:[%s3 + $0x38] sm:$0xf]
    %v186 = vld [vmem:[%s3 + $0x3c] sm:$0xf]
    %v187 = vld [vmem:[%s4] sm:$0x1]
    %v189 = vlaneseq
    %v190 = vshrl.u32 %v189, 7
    %v191 = vsub.s32 0, %v190
    %v192 = vrot.slane %v187, %v191
    %v210 = vunpack.c.l.b16 %v171
    %v211 = vunpack.c.l.b16 %v172
    %v212 = vunpack.c.l.b16 %v173
    %v213 = vunpack.c.l.b16 %v174
    %v214 = vunpack.c.l.b16 %v175
    %v215 = vunpack.c.l.b16 %v176
    %v216 = vunpack.c.l.b16 %v177
    %v217 = vunpack.c.l.b16 %v178
    %v218 = vunpack.c.l.b16 %v179
    %v219 = vunpack.c.l.b16 %v180
    %v220 = vunpack.c.l.b16 %v181
    %v221 = vunpack.c.l.b16 %v182
    %v222 = vunpack.c.l.b16 %v183
    %v223 = vunpack.c.l.b16 %v184
    %v224 = vunpack.c.l.b16 %v185
    %v225 = vunpack.c.l.b16 %v186
    %v226 = vpack.c.b16 %v211, %v210
    %v227 = vpack.c.b16 %v213, %v212
    %v228 = vpack.c.b16 %v215, %v214
    %v229 = vpack.c.b16 %v217, %v216
    %v230 = vpack.c.b16 %v219, %v218
    %v231 = vpack.c.b16 %v221, %v220
    %v232 = vpack.c.b16 %v223, %v222
    %v233 = vpack.c.b16 %v225, %v224
    %242 = vmatprep.subr.bf16.mxu0 0
    %243 = vmatpush1.bf16.msra.mxu0 %v226
    %244 = vmatprep.subr.bf16.mxu0 0
    %245 = vmatpush1.bf16.msra.mxu0 %v227
    %246 = vmatprep.subr.bf16.mxu0 0
    %247 = vmatpush1.bf16.msra.mxu0 %v228
    %248 = vmatprep.subr.bf16.mxu0 0
    %249 = vmatpush1.bf16.msra.mxu0 %v229
    %250 = vmatprep.subr.bf16.mxu0 0
    %251 = vmatpush1.bf16.msra.mxu0 %v230
    %252 = vmatprep.subr.bf16.mxu0 0
    %253 = vmatpush1.bf16.msra.mxu0 %v231
    %254 = vmatprep.subr.bf16.mxu0 0
    %255 = vmatpush1.bf16.msra.mxu0 %v232
    %256 = vmatprep.subr.bf16.mxu0 0
    %257 = vmatpush1.bf16.msra.mxu0 %v233
    %258 = vmatprep.subr.bf16.mxu0 0
    %259 = vmatpush1.bf16.msra.mxu0 0
    %260 = vmatprep.subr.bf16.mxu0 0
    %261 = vmatpush1.bf16.msra.mxu0 0
    %262 = vmatprep.subr.bf16.mxu0 0
    %263 = vmatpush1.bf16.msra.mxu0 0
    %264 = vmatprep.subr.bf16.mxu0 0
    %265 = vmatpush1.bf16.msra.mxu0 0
    %266 = vmatprep.subr.bf16.mxu0 0
    %267 = vmatpush1.bf16.msra.mxu0 0
    %268 = vmatprep.subr.bf16.mxu0 0
    %269 = vmatpush1.bf16.msra.mxu0 0
    %270 = vmatprep.subr.bf16.mxu0 0
    %271 = vmatpush1.bf16.msra.mxu0 0
    %272 = vmatprep.subr.bf16.mxu0 0
    %273 = vmatpush1.bf16.msra.mxu0 0
    %274 = vmatprep.mubr.bf16.mxu0 0
    %275 = vmatmul.mubr.bf16.gmra.mrb[0].mxu0 %v170
    %v276 = vpop.f32.mrb[0].mxu0
    %v277 = vadd.f32 %v192, %v276
    %v278 = vpop.f32.mrb[0].mxu0
    %v279 = vpop.f32.mrb[0].mxu0
    %v280 = vpop.f32.mrb[0].mxu0
    %281 = vdwg.mxu0
    %v282 = vmax.f32 %v277, 0.0
    %v283 = vpack.c.bf16 %v282, %v282
    %v284 = vld [vmem:[#allocation5] sm:$0xf]
    %v285 = vld [vmem:[#allocation5 + $0x4] sm:$0xf]
    %v286 = vld [vmem:[#allocation5 + $0x8] sm:$0xf]
    %v287 = vld [vmem:[#allocation5 + $0xc] sm:$0xf]
    %v288 = vld [vmem:[#allocation5 + $0x10] sm:$0xf]
    %v289 = vld [vmem:[#allocation5 + $0x14] sm:$0xf]
    %v290 = vld [vmem:[#allocation5 + $0x18] sm:$0xf]
    %v291 = vld [vmem:[#allocation5 + $0x1c] sm:$0xf]
    %v292 = vld [vmem:[#allocation5 + $0x20] sm:$0xf]
    %v293 = vld [vmem:[#allocation5 + $0x24] sm:$0xf]
    %v294 = vld [vmem:[#allocation5 + $0x28] sm:$0xf]
    %v295 = vld [vmem:[#allocation5 + $0x2c] sm:$0xf]
    %v296 = vld [vmem:[#allocation5 + $0x30] sm:$0xf]
    %v297 = vld [vmem:[#allocation5 + $0x34] sm:$0xf]
    %v298 = vld [vmem:[#allocation5 + $0x38] sm:$0xf]
    %v299 = vld [vmem:[#allocation5 + $0x3c] sm:$0xf]
    %v300 = vld [vmem:[%s6] sm:$0x1]
    %v302 = vlaneseq
    %v303 = vshrl.u32 %v302, 7
    %v304 = vsub.s32 0, %v303
    %v305 = vrot.slane %v300, %v304
    %v323 = vunpack.c.l.b16 %v284
    %v324 = vunpack.c.l.b16 %v285
    %v325 = vunpack.c.l.b16 %v286
    %v326 = vunpack.c.l.b16 %v287
    %v327 = vunpack.c.l.b16 %v288
    %v328 = vunpack.c.l.b16 %v289
    %v329 = vunpack.c.l.b16 %v290
    %v330 = vunpack.c.l.b16 %v291
    %v331 = vunpack.c.l.b16 %v292
    %v332 = vunpack.c.l.b16 %v293
    %v333 = vunpack.c.l.b16 %v294
    %v334 = vunpack.c.l.b16 %v295
    %v335 = vunpack.c.l.b16 %v296
    %v336 = vunpack.c.l.b16 %v297
    %v337 = vunpack.c.l.b16 %v298
    %v338 = vunpack.c.l.b16 %v299
    %v339 = vpack.c.b16 %v324, %v323
    %v340 = vpack.c.b16 %v326, %v325
    %v341 = vpack.c.b16 %v328, %v327
    %v342 = vpack.c.b16 %v330, %v329
    %v343 = vpack.c.b16 %v332, %v331
    %v344 = vpack.c.b16 %v334, %v333
    %v345 = vpack.c.b16 %v336, %v335
    %v346 = vpack.c.b16 %v338, %v337
    %355 = vmatprep.subr.bf16.mxu0 0
    %356 = vmatpush1.bf16.msra.mxu0 %v339
    %357 = vmatprep.subr.bf16.mxu0 0
    %358 = vmatpush1.bf16.msra.mxu0 %v340
    %359 = vmatprep.subr.bf16.mxu0 0
    %360 = vmatpush1.bf16.msra.mxu0 %v341
    %361 = vmatprep.subr.bf16.mxu0 0
    %362 = vmatpush1.bf16.msra.mxu0 %v342
    %363 = vmatprep.subr.bf16.mxu0 0
    %364 = vmatpush1.bf16.msra.mxu0 %v343
    %365 = vmatprep.subr.bf16.mxu0 0
    %366 = vmatpush1.bf16.msra.mxu0 %v344
    %367 = vmatprep.subr.bf16.mxu0 0
    %368 = vmatpush1.bf16.msra.mxu0 %v345
    %369 = vmatprep.subr.bf16.mxu0 0
    %370 = vmatpush1.bf16.msra.mxu0 %v346
    %371 = vmatprep.subr.bf16.mxu0 0
    %372 = vmatpush1.bf16.msra.mxu0 0
    %373 = vmatprep.subr.bf16.mxu0 0
    %374 = vmatpush1.bf16.msra.mxu0 0
    %375 = vmatprep.subr.bf16.mxu0 0
    %376 = vmatpush1.bf16.msra.mxu0 0
    %377 = vmatprep.subr.bf16.mxu0 0
    %378 = vmatpush1.bf16.msra.mxu0 0
    %379 = vmatprep.subr.bf16.mxu0 0
    %380 = vmatpush1.bf16.msra.mxu0 0
    %381 = vmatprep.subr.bf16.mxu0 0
    %382 = vmatpush1.bf16.msra.mxu0 0
    %383 = vmatprep.subr.bf16.mxu0 0
    %384 = vmatpush1.bf16.msra.mxu0 0
    %385 = vmatprep.subr.bf16.mxu0 0
    %386 = vmatpush1.bf16.msra.mxu0 0
    %387 = vmatprep.mubr.bf16.mxu0 0
    %388 = vmatmul.mubr.bf16.gmra.mrb[0].mxu0 %v283
    %v389 = vpop.f32.mrb[0].mxu0
    %v390 = vadd.f32 %v305, %v389
    %v391 = vpop.f32.mrb[0].mxu0
    %v392 = vpop.f32.mrb[0].mxu0
    %v393 = vpop.f32.mrb[0].mxu0
    %394 = vdwg.mxu0
    %v395 = vtanh.pop %v390
    %v396 = vpack.c.bf16 %v395, %v395
    %v397 = vld [vmem:[#allocation7] sm:$0xf]
    %v398 = vld [vmem:[#allocation7 + $0x4] sm:$0xf]
    %v399 = vld [vmem:[#allocation7 + $0x8] sm:$0xf]
    %v400 = vld [vmem:[#allocation7 + $0xc] sm:$0xf]
    %v401 = vld [vmem:[#allocation7 + $0x10] sm:$0xf]
    %v402 = vld [vmem:[#allocation7 + $0x14] sm:$0xf]
    %v403 = vld [vmem:[#allocation7 + $0x18] sm:$0xf]
    %v404 = vld [vmem:[#allocation7 + $0x1c] sm:$0xf]
    %v405 = vld [vmem:[#allocation7 + $0x20] sm:$0xf]
    %v406 = vld [vmem:[#allocation7 + $0x24] sm:$0xf]
    %v407 = vld [vmem:[#allocation7 + $0x28] sm:$0xf]
    %v408 = vld [vmem:[#allocation7 + $0x2c] sm:$0xf]
    %v409 = vld [vmem:[#allocation7 + $0x30] sm:$0xf]
    %v410 = vld [vmem:[#allocation7 + $0x34] sm:$0xf]
    %v411 = vld [vmem:[#allocation7 + $0x38] sm:$0xf]
    %v412 = vld [vmem:[#allocation7 + $0x3c] sm:$0xf]
    %v429 = vunpack.c.l.b16 %v397
    %v430 = vunpack.c.l.b16 %v398
    %v431 = vunpack.c.l.b16 %v399
    %v432 = vunpack.c.l.b16 %v400
    %v433 = vunpack.c.l.b16 %v401
    %v434 = vunpack.c.l.b16 %v402
    %v435 = vunpack.c.l.b16 %v403
    %v436 = vunpack.c.l.b16 %v404
    %v437 = vunpack.c.l.b16 %v405
    %v438 = vunpack.c.l.b16 %v406
    %v439 = vunpack.c.l.b16 %v407
    %v440 = vunpack.c.l.b16 %v408
    %v441 = vunpack.c.l.b16 %v409
    %v442 = vunpack.c.l.b16 %v410
    %v443 = vunpack.c.l.b16 %v411
    %v444 = vunpack.c.l.b16 %v412
    %v445 = vpack.c.b16 %v430, %v429
    %v446 = vpack.c.b16 %v432, %v431
    %v447 = vpack.c.b16 %v434, %v433
    %v448 = vpack.c.b16 %v436, %v435
    %v449 = vpack.c.b16 %v438, %v437
    %v450 = vpack.c.b16 %v440, %v439
    %v451 = vpack.c.b16 %v442, %v441
    %v452 = vpack.c.b16 %v444, %v443
    %461 = vmatprep.subr.bf16.mxu0 0
    %462 = vmatpush1.bf16.msra.mxu0 %v445
    %463 = vmatprep.subr.bf16.mxu0 0
    %464 = vmatpush1.bf16.msra.mxu0 %v446
    %465 = vmatprep.subr.bf16.mxu0 0
    %466 = vmatpush1.bf16.msra.mxu0 %v447
    %467 = vmatprep.subr.bf16.mxu0 0
    %468 = vmatpush1.bf16.msra.mxu0 %v448
    %469 = vmatprep.subr.bf16.mxu0 0
    %470 = vmatpush1.bf16.msra.mxu0 %v449
    %471 = vmatprep.subr.bf16.mxu0 0
    %472 = vmatpush1.bf16.msra.mxu0 %v450
    %473 = vmatprep.subr.bf16.mxu0 0
    %474 = vmatpush1.bf16.msra.mxu0 %v451
    %475 = vmatprep.subr.bf16.mxu0 0
    %476 = vmatpush1.bf16.msra.mxu0 %v452
    %477 = vmatprep.subr.bf16.mxu0 0
    %478 = vmatpush1.bf16.msra.mxu0 0
    %479 = vmatprep.subr.bf16.mxu0 0
    %480 = vmatpush1.bf16.msra.mxu0 0
    %481 = vmatprep.subr.bf16.mxu0 0
    %482 = vmatpush1.bf16.msra.mxu0 0
    %483 = vmatprep.subr.bf16.mxu0 0
    %484 = vmatpush1.bf16.msra.mxu0 0
    %485 = vmatprep.subr.bf16.mxu0 0
    %486 = vmatpush1.bf16.msra.mxu0 0
    %487 = vmatprep.subr.bf16.mxu0 0
    %488 = vmatpush1.bf16.msra.mxu0 0
    %489 = vmatprep.subr.bf16.mxu0 0
    %490 = vmatpush1.bf16.msra.mxu0 0
    %491 = vmatprep.subr.bf16.mxu0 0
    %492 = vmatpush1.bf16.msra.mxu0 0
    %493 = vmatprep.mubr.bf16.mxu0 0
    %494 = vmatmul.mubr.bf16.gmra.mrb[0].mxu0 %v396
    %v495 = vpop.f32.mrb[0].mxu0
    %v496 = vadd.f32 0.0, %v495
    %v497 = vpop.f32.mrb[0].mxu0
    %v498 = vpop.f32.mrb[0].mxu0
    %v499 = vpop.f32.mrb[0].mxu0
    %500 = vdwg.mxu0
    %v501 = vadd.f32 %v165, %v496
    %v502 = vmax.f32 %v501, 0.0
    %v503 = vpack.c.bf16 %v502, %v502
    %v504 = vld [vmem:[#allocation8] sm:$0xf]
    %v505 = vld [vmem:[#allocation8 + $0x4] sm:$0xf]
    %v506 = vld [vmem:[#allocation8 + $0x8] sm:$0xf]
    %v507 = vld [vmem:[#allocation8 + $0xc] sm:$0xf]
    %v508 = vld [vmem:[#allocation8 + $0x10] sm:$0xf]
    %v509 = vld [vmem:[#allocation8 + $0x14] sm:$0xf]
    %v510 = vld [vmem:[#allocation8 + $0x18] sm:$0xf]
    %v511 = vld [vmem:[#allocation8 + $0x1c] sm:$0xf]
    %v512 = vld [vmem:[#allocation8 + $0x20] sm:$0xf]
    %v513 = vld [vmem:[#allocation8 + $0x24] sm:$0xf]
    %v514 = vld [vmem:[#allocation8 + $0x28] sm:$0xf]
    %v515 = vld [vmem:[#allocation8 + $0x2c] sm:$0xf]
    %v516 = vld [vmem:[#allocation8 + $0x30] sm:$0xf]
    %v517 = vld [vmem:[#allocation8 + $0x34] sm:$0xf]
    %v518 = vld [vmem:[#allocation8 + $0x38] sm:$0xf]
    %v519 = vld [vmem:[#allocation8 + $0x3c] sm:$0xf]
    %v520 = vld [vmem:[%s9] sm:$0x1]
    %v522 = vlaneseq
    %v523 = vshrl.u32 %v522, 7
    %v524 = vsub.s32 0, %v523
    %v525 = vrot.slane %v520, %v524
    %v543 = vunpack.c.l.b16 %v504
    %v544 = vunpack.c.l.b16 %v505
    %v545 = vunpack.c.l.b16 %v506
    %v546 = vunpack.c.l.b16 %v507
    %v547 = vunpack.c.l.b16 %v508
    %v548 = vunpack.c.l.b16 %v509
    %v549 = vunpack.c.l.b16 %v510
    %v550 = vunpack.c.l.b16 %v511
    %v551 = vunpack.c.l.b16 %v512
    %v552 = vunpack.c.l.b16 %v513
    %v553 = vunpack.c.l.b16 %v514
    %v554 = vunpack.c.l.b16 %v515
    %v555 = vunpack.c.l.b16 %v516
    %v556 = vunpack.c.l.b16 %v517
    %v557 = vunpack.c.l.b16 %v518
    %v558 = vunpack.c.l.b16 %v519
    %v559 = vpack.c.b16 %v544, %v543
    %v560 = vpack.c.b16 %v546, %v545
    %v561 = vpack.c.b16 %v548, %v547
    %v562 = vpack.c.b16 %v550, %v549
    %v563 = vpack.c.b16 %v552, %v551
    %v564 = vpack.c.b16 %v554, %v553
    %v565 = vpack.c.b16 %v556, %v555
    %v566 = vpack.c.b16 %v558, %v557
    %575 = vmatprep.subr.bf16.mxu0 0
    %576 = vmatpush1.bf16.msra.mxu0 %v559
    %577 = vmatprep.subr.bf16.mxu0 0
    %578 = vmatpush1.bf16.msra.mxu0 %v560
    %579 = vmatprep.subr.bf16.mxu0 0
    %580 = vmatpush1.bf16.msra.mxu0 %v561
    %581 = vmatprep.subr.bf16.mxu0 0
    %582 = vmatpush1.bf16.msra.mxu0 %v562
    %583 = vmatprep.subr.bf16.mxu0 0
    %584 = vmatpush1.bf16.msra.mxu0 %v563
    %585 = vmatprep.subr.bf16.mxu0 0
    %586 = vmatpush1.bf16.msra.mxu0 %v564
    %587 = vmatprep.subr.bf16.mxu0 0
    %588 = vmatpush1.bf16.msra.mxu0 %v565
    %589 = vmatprep.subr.bf16.mxu0 0
    %590 = vmatpush1.bf16.msra.mxu0 %v566
    %591 = vmatprep.subr.bf16.mxu0 0
    %592 = vmatpush1.bf16.msra.mxu0 0
    %593 = vmatprep.subr.bf16.mxu0 0
    %594 = vmatpush1.bf16.msra.mxu0 0
    %595 = vmatprep.subr.bf16.mxu0 0
    %596 = vmatpush1.bf16.msra.mxu0 0
    %597 = vmatprep.subr.bf16.mxu0 0
    %598 = vmatpush1.bf16.msra.mxu0 0
    %599 = vmatprep.subr.bf16.mxu0 0
    %600 = vmatpush1.bf16.msra.mxu0 0
    %601 = vmatprep.subr.bf16.mxu0 0
    %602 = vmatpush1.bf16.msra.mxu0 0
    %603 = vmatprep.subr.bf16.mxu0 0
    %604 = vmatpush1.bf16.msra.mxu0 0
    %605 = vmatprep.subr.bf16.mxu0 0
    %606 = vmatpush1.bf16.msra.mxu0 0
    %607 = vmatprep.mubr.bf16.mxu0 0
    %608 = vmatmul.mubr.bf16.gmra.mrb[0].mxu0 %v503
    %v609 = vpop.f32.mrb[0].mxu0
    %v610 = vadd.f32 %v525, %v609
    %v611 = vpop.f32.mrb[0].mxu0
    %v612 = vpop.f32.mrb[0].mxu0
    %v613 = vpop.f32.mrb[0].mxu0
    %614 = vdwg.mxu0
    %v615 = vmax.f32 %v610, 0.0
    %v616 = vpack.c.bf16 %v615, %v615
    %v617 = vld [vmem:[%s10] sm:$0xf]
    %v618 = vld [vmem:[%s10 + $0x4] sm:$0xf]
    %v619 = vld [vmem:[%s10 + $0x8] sm:$0xf]
    %v620 = vld [vmem:[%s10 + $0xc] sm:$0xf]
    %v621 = vld [vmem:[%s10 + $0x10] sm:$0xf]
    %v622 = vld [vmem:[%s10 + $0x14] sm:$0xf]
    %v623 = vld [vmem:[%s10 + $0x18] sm:$0xf]
    %v624 = vld [vmem:[%s10 + $0x1c] sm:$0xf]
    %v625 = vld [vmem:[%s10 + $0x20] sm:$0xf]
    %v626 = vld [vmem:[%s10 + $0x24] sm:$0xf]
    %v627 = vld [vmem:[%s10 + $0x28] sm:$0xf]
    %v628 = vld [vmem:[%s10 + $0x2c] sm:$0xf]
    %v629 = vld [vmem:[%s10 + $0x30] sm:$0xf]
    %v630 = vld [vmem:[%s10 + $0x34] sm:$0xf]
    %v631 = vld [vmem:[%s10 + $0x38] sm:$0xf]
    %v632 = vld [vmem:[%s10 + $0x3c] sm:$0xf]
    %v633 = vld [vmem:[%s11] sm:$0x1]
    %v635 = vlaneseq
    %v636 = vshrl.u32 %v635, 7
    %v637 = vsub.s32 0, %v636
    %v638 = vrot.slane %v633, %v637
    %v656 = vunpack.c.l.b16 %v617
    %v657 = vunpack.c.l.b16 %v618
    %v658 = vunpack.c.l.b16 %v619
    %v659 = vunpack.c.l.b16 %v620
    %v660 = vunpack.c.l.b16 %v621
    %v661 = vunpack.c.l.b16 %v622
    %v662 = vunpack.c.l.b16 %v623
    %v663 = vunpack.c.l.b16 %v624
    %v664 = vunpack.c.l.b16 %v625
    %v665 = vunpack.c.l.b16 %v626
    %v666 = vunpack.c.l.b16 %v627
    %v667 = vunpack.c.l.b16 %v628
    %v668 = vunpack.c.l.b16 %v629
    %v669 = vunpack.c.l.b16 %v630
    %v670 = vunpack.c.l.b16 %v631
    %v671 = vunpack.c.l.b16 %v632
    %v672 = vpack.c.b16 %v657, %v656
    %v673 = vpack.c.b16 %v659, %v658
    %v674 = vpack.c.b16 %v661, %v660
    %v675 = vpack.c.b16 %v663, %v662
    %v676 = vpack.c.b16 %v665, %v664
    %v677 = vpack.c.b16 %v667, %v666
    %v678 = vpack.c.b16 %v669, %v668
    %v679 = vpack.c.b16 %v671, %v670
    %688 = vmatprep.subr.bf16.mxu0 0
    %689 = vmatpush1.bf16.msra.mxu0 %v672
    %690 = vmatprep.subr.bf16.mxu0 0
    %691 = vmatpush1.bf16.msra.mxu0 %v673
    %692 = vmatprep.subr.bf16.mxu0 0
    %693 = vmatpush1.bf16.msra.mxu0 %v674
    %694 = vmatprep.subr.bf16.mxu0 0
    %695 = vmatpush1.bf16.msra.mxu0 %v675
    %696 = vmatprep.subr.bf16.mxu0 0
    %697 = vmatpush1.bf16.msra.mxu0 %v676
    %698 = vmatprep.subr.bf16.mxu0 0
    %699 = vmatpush1.bf16.msra.mxu0 %v677
    %700 = vmatprep.subr.bf16.mxu0 0
    %701 = vmatpush1.bf16.msra.mxu0 %v678
    %702 = vmatprep.subr.bf16.mxu0 0
    %703 = vmatpush1.bf16.msra.mxu0 %v679
    %704 = vmatprep.subr.bf16.mxu0 0
    %705 = vmatpush1.bf16.msra.mxu0 0
    %706 = vmatprep.subr.bf16.mxu0 0
    %707 = vmatpush1.bf16.msra.mxu0 0
    %708 = vmatprep.subr.bf16.mxu0 0
    %709 = vmatpush1.bf16.msra.mxu0 0
    %710 = vmatprep.subr.bf16.mxu0 0
    %711 = vmatpush1.bf16.msra.mxu0 0
    %712 = vmatprep.subr.bf16.mxu0 0
    %713 = vmatpush1.bf16.msra.mxu0 0
    %714 = vmatprep.subr.bf16.mxu0 0
    %715 = vmatpush1.bf16.msra.mxu0 0
    %716 = vmatprep.subr.bf16.mxu0 0
    %717 = vmatpush1.bf16.msra.mxu0 0
    %718 = vmatprep.subr.bf16.mxu0 0
    %719 = vmatpush1.bf16.msra.mxu0 0
    %720 = vmatprep.mubr.bf16.mxu0 0
    %721 = vmatmul.mubr.bf16.gmra.mrb[0].mxu0 %v616
    %v722 = vpop.f32.mrb[0].mxu0
    %v723 = vadd.f32 %v638, %v722
    %v724 = vpop.f32.mrb[0].mxu0
    %v725 = vpop.f32.mrb[0].mxu0
    %v726 = vpop.f32.mrb[0].mxu0
    %727 = vdwg.mxu0
    %vm728 = vcmask 64512
    %729 = vst.msk [vmem:[#allocation10] sm:$0xff] %vm728, %v723
    // Predicated region
    $region66: #{tpu_custom_call.1} parent=1 // pred_check
      _
    $region67: #{tpu_custom_call.1} parent=1 // pred_check_branch
      %731 = sbr.rel (0) target = $region69
    $region68: #{tpu_custom_call.1} parent=1 // pred_region
      %s733 = ssub.s32 128, 128
      %734 = vsyncadd [#allocation4], %s733
      %s736 = sshll.u32 [#allocation10], 4
      %s737 = int_to_ptr.vmem [resolvable:$true] %s736
      %739 = dma.vmem_to_hbm [thread:$0]  %s737, 128, %s12, [#allocation4]
    $region69: #{tpu_custom_call.1} parent=1 // pred_fallthru
      _
    // Predicated region
    $region70: #{tpu_custom_call.1} parent=1 // pred_check
      _
    $region71: #{tpu_custom_call.1} parent=1 // pred_check_branch
      %741 = sbr.rel (0) target = $region73
    $region72: #{tpu_custom_call.1} parent=1 // pred_region
      %742 = dma.done [#allocation4], 128
    $region73: #{tpu_custom_call.1} parent=1 // pred_fallthru
      _
    %743 = vsyncpa [#allocation3], 1
    %744 = vsyncpa [#allocation6], 1
    %745 = vsyncpa [#allocation9], 1
    %746 = vsyncpa [#allocation4], 1

</llo_original>
